<compile_context>
chip_gen: v5e
topology: v5e:2x2
jax: 0.10.0
libtpu: 0.0.40
codegen_flags: <defaults>
</compile_context>

<pallas_src>
import math
from functools import lru_cache

import numpy as np
import jax
import jax.numpy as jnp
from jax.experimental import pallas as pl
from jax.experimental.pallas import tpu as pltpu


# ----------------------------------------------------------------------------
# Filter construction (matches torch kaiser_sinc_filter1d, float32)
# ----------------------------------------------------------------------------
def _kaiser_window(n: int, beta: float) -> jnp.ndarray:
    if n == 1:
        return jnp.ones((1,), dtype=jnp.float32)
    k = jnp.arange(n, dtype=jnp.float32)
    arg = beta * jnp.sqrt(jnp.clip(1.0 - (2.0 * k / (n - 1) - 1.0) ** 2, 0.0, 1.0))
    i0 = jax.scipy.special.i0
    return (i0(arg) / i0(jnp.float32(beta))).astype(jnp.float32)


def kaiser_sinc_filter1d(cutoff: float, half_width: float, kernel_size: int) -> jnp.ndarray:
    even = kernel_size % 2 == 0
    half_size = kernel_size // 2
    delta_f = 4.0 * half_width
    A = 2.285 * (half_size - 1) * math.pi * delta_f + 7.95
    if A > 50.0:
        beta = 0.1102 * (A - 8.7)
    elif A >= 21.0:
        beta = 0.5842 * (A - 21.0) ** 0.4 + 0.07886 * (A - 21.0)
    else:
        beta = 0.0
    window = _kaiser_window(kernel_size, beta)
    if even:
        time = jnp.arange(-half_size, half_size, dtype=jnp.float32) + 0.5
    else:
        time = jnp.arange(kernel_size, dtype=jnp.float32) - half_size
    if cutoff == 0:
        return jnp.zeros_like(time)
    filt = 2.0 * cutoff * window * jnp.sinc(2.0 * cutoff * time)
    filt = filt / jnp.sum(filt)
    return filt.astype(jnp.float32)  # (K,)


def _round_up(x: int, m: int) -> int:
    return ((x + m - 1) // m) * m


# ----------------------------------------------------------------------------
# Hardware probing (best effort; robust fallbacks)
# ----------------------------------------------------------------------------
@lru_cache(maxsize=1)
def _tpu_generation() -> str:
    try:
        kind = jax.devices()[0].device_kind.lower()
    except Exception:
        return "unknown"
    for g in ("v7", "v6", "v5"):
        if g in kind:
            return g
    return "unknown"


@lru_cache(maxsize=1)
def _vmem_cap_bytes() -> int:
    try:
        return int(pltpu.get_tpu_info().vmem_capacity_bytes)
    except Exception:
        return (64 << 20) if _tpu_generation() == "v7" else (128 << 20)


# ----------------------------------------------------------------------------
# Static tiling plan for the banded upsample matmul
# ----------------------------------------------------------------------------
def _make_plan(T, ratio, stride, pad, pad_left, K, tile_k, cbytes, vmem_budget):
    def halo(TN_):
        a = -(-(pad_left - K + 1) // stride) - pad - 1      # ceil-div, -1 margin
        b = (TN_ - 1 + pad_left) // stride - pad + 1        # +1 margin
        return a, b

    TK = max(128, _round_up(int(tile_k), 128))
    while True:                                             # fit per-step VMEM budget
        TN = TK * ratio
        a, b = halo(TN)
        TKE = _round_up(b - a + 1, 128)
        need = 2 * (256 * TKE * cbytes + 256 * TN * 4 + 4 * TKE * TN * cbytes)
        if need <= vmem_budget or TK <= 128:
            break
        TK = max(128, (TK // 2 // 128) * 128)

    if T <= TK:
        # single-tile dense path: every block dim equals the full array dim
        TK = T
        TN = T * ratio
        a, b = halo(TN)
        TKE = _round_up(b - a + 1, 16)
        n_tiles = 1
    else:
        n_tiles = -(-T // TK)
        if n_tiles > 4:
            # interior-block shift invariance needs the halo to stay within one
            # neighbouring tile on each side (always true for sane kernel_size)
            assert TK + a >= 0 and a + TKE - 1 <= 2 * TK - 2, \
                "kernel_size too large for the chosen tile size"
    b = a + TKE - 1

    # distinct operator blocks: all if few tiles, else
    # [left edge, interior representative, second-to-last, right edge]
    jj_list = list(range(n_tiles)) if n_tiles <= 4 else [0, 1, n_tiles - 2, n_tiles - 1]

    return dict(T=T, ratio=ratio, stride=stride, pad=pad, pad_left=pad_left, K=K,
                TK=TK, TN=TN, TKE=TKE, a=a, b=b, n_tiles=n_tiles,
                jj_list=jj_list, T_out=T * ratio)


# ----------------------------------------------------------------------------
# Banded operator blocks (built once in float64, cached; ratio/pad/crop folded)
# ----------------------------------------------------------------------------
def _build_m_blocks(filt, plan, dtype):
    w = np.asarray(filt, dtype=np.float64)
    T, ratio, stride = plan["T"], plan["ratio"], plan["stride"]
    pad, pad_left, K = plan["pad"], plan["pad_left"], plan["K"]
    TK, TN, TKE, a = plan["TK"], plan["TN"], plan["TKE"], plan["a"]
    T_out = plan["T_out"]

    d = np.arange(TKE)[:, None]
    n = np.arange(TN)[None, :]

    def taps(m, i):                              # i is an index into the padded input
        k = m + pad_left - stride * i
        valid = (k >= 0) & (k < K)
        return np.where(valid, w[np.clip(k, 0, K - 1)], 0.0)

    blocks = []
    for jj in plan["jj_list"]:
        t = jj * TK + a + d                      # (TKE, 1) unpadded input sample idx
        m = jj * TN + n                          # (1, TN)  output sample idx
        val = np.where((t >= 0) & (t < T), taps(m, t + pad), 0.0)
        extra0 = np.zeros((1, TN))
        for i in range(pad):                     # left replicate-pad positions
            extra0 = extra0 + taps(m, i)
        val = val + np.where(t == 0, extra0, 0.0)
        extraT = np.zeros((1, TN))
        for i in range(T + pad, T + 2 * pad):    # right replicate-pad positions
            extraT = extraT + taps(m, i)
        val = val + np.where(t == T - 1, extraT, 0.0)
        val = np.where(m < T_out, val, 0.0)      # fold the right crop / ragged tile
        blocks.append(ratio * val)               # fold the ratio scale in
    mb = np.stack(blocks, axis=0)                # (n_sel, TKE, TN)
    return jnp.asarray(mb, dtype=dtype)


def _frame_indices(plan):
    TK, TKE, n_tiles, a = plan["TK"], plan["TKE"], plan["n_tiles"], plan["a"]
    idx = np.arange(n_tiles)[:, None] * TK + a + np.arange(TKE)[None, :]
    return jnp.asarray(idx, dtype=jnp.int32)     # OOB / negative rows carry 0 weight


# ----------------------------------------------------------------------------
# Pallas kernel: one lane-dense banded matmul per (output-tile, row-tile)
# ----------------------------------------------------------------------------
def _make_kernel(n_tiles, n_sel, m_resident):
    def kernel(x_ref, m_ref, o_ref):
        if not m_resident:
            sel = 0                               # index_map already picked the block
        elif n_sel == n_tiles:
            sel = pl.program_id(0)
        else:
            j = pl.program_id(0)
            sel = jnp.minimum(j, 1) + jnp.maximum(j - (n_tiles - 3), 0)
        o_ref[...] = jnp.dot(x_ref[...], m_ref[sel],
                             preferred_element_type=jnp.float32).astype(o_ref.dtype)
    return kernel


def upsample1d_pallas(x, m_blocks, frame_idx, plan, compute_dtype, out_dtype, vmem_cap):
    B, C, T = x.shape
    assert T == plan["T"]
    T_out, TN, TKE, n_tiles = plan["T_out"], plan["TN"], plan["TKE"], plan["n_tiles"]
    n_sel = int(m_blocks.shape[0])
    cdtype = jnp.dtype(compute_dtype)
    odtype = jnp.dtype(out_dtype)
    cbytes, obytes = cdtype.itemsize, odtype.itemsize

    R = B * C
    RB = R if R <= 256 else 256
    n_row = -(-R // RB)

    # Wrapper data movement: a single fused pad+frame gather (no transpose, no
    # separate pad pass); the reshape to the flat lane-dense layout is free.
    x2d = x.reshape(R, T)
    if x2d.dtype != cdtype:
        x2d = x2d.astype(cdtype)
    xf = jnp.take(x2d, frame_idx, axis=1, mode="fill",
                  fill_value=x2d.dtype.type(0))          # (R, n_tiles, TKE)
    xf = xf.reshape(R, n_tiles * TKE)

    # VMEM budgeting (generation aware; v7x has only 64 MiB).
    cap = min(100 << 20, int(vmem_cap * 0.85))
    tile_bytes2 = 2 * (RB * TKE * cbytes + RB * TN * obytes)
    m_bytes2 = 2 * n_sel * TKE * TN * cbytes
    m_resident = m_bytes2 <= max(cap - tile_bytes2 - (8 << 20), 0)

    if m_resident:
        m_spec = pl.BlockSpec((n_sel, TKE, TN), lambda j, r: (0, 0, 0))
        m_need = m_bytes2
    else:
        if n_sel == n_tiles:
            m_map = lambda j, r: (j, 0, 0)
        else:
            m_map = lambda j, r: (jnp.minimum(j, 1)
                                  + jnp.maximum(j - (n_tiles - 3), 0), 0, 0)
        m_spec = pl.BlockSpec((1, TKE, TN), m_map)
        m_need = 2 * TKE * TN * cbytes

    vmem_limit = int(min(max(tile_bytes2 + m_need + (4 << 20), 32 << 20), cap))

    cost = pl.CostEstimate(
        flops=2 * n_row * RB * TKE * n_tiles * TN,
        transcendentals=0,
        bytes_accessed=int(xf.size) * cbytes + int(m_blocks.size) * cbytes
                       + R * T_out * obytes)

    # Exact output shape: ragged last row/time blocks use masked partial stores,
    # so no post-kernel crop copy is ever needed.
    y2d = pl.pallas_call(
        _make_kernel(n_tiles, n_sel, m_resident),
        out_shape=jax.ShapeDtypeStruct((R, T_out), odtype),
        grid=(n_tiles, n_row),                     # rows innermost
        in_specs=[
            pl.BlockSpec((RB, TKE), lambda j, r: (r, j)),
            m_spec,
        ],
        out_specs=pl.BlockSpec((RB, TN), lambda j, r: (r, j)),
        compiler_params=pltpu.CompilerParams(
            dimension_semantics=("parallel", "parallel"),
            vmem_limit_bytes=vmem_limit),
        cost_estimate=cost,
    )(xf, m_blocks)

    return y2d.reshape(B, C, T_out)


# ----------------------------------------------------------------------------
# Module equivalent
# ----------------------------------------------------------------------------
class UpSample1d:
    def __init__(self, ratio: int = 2, kernel_size=None, tile_k=None, out_dtype=None):
        self.ratio = ratio
        self.kernel_size = int(6 * ratio // 2) * 2 if kernel_size is None else kernel_size
        self.stride = ratio
        self.pad = self.kernel_size // ratio - 1
        self.pad_left = self.pad * self.stride + (self.kernel_size - self.stride) // 2
        self.pad_right = self.pad * self.stride + (self.kernel_size - self.stride + 1) // 2
        self.tile_k = tile_k          # None -> per-generation default
        self.out_dtype = out_dtype    # None -> x.dtype
        self.upsample_filter = kaiser_sinc_filter1d(
            cutoff=0.5 / ratio, half_width=0.6 / ratio, kernel_size=self.kernel_size)
        self._cache = {}              # (T, cdtype, tile_k) -> (plan, M blocks, frame idx)

    def _plan_for(self, T, cdtype, tile_k):
        key = (int(T), jnp.dtype(cdtype).name, int(tile_k))
        if key not in self._cache:
            cap = min(100 << 20, int(_vmem_cap_bytes() * 0.85))
            budget = max(cap - (8 << 20), 16 << 20)
            plan = _make_plan(T, self.ratio, self.stride, self.pad, self.pad_left,
                              self.kernel_size, tile_k, jnp.dtype(cdtype).itemsize,
                              budget)
            m_blocks = _build_m_blocks(self.upsample_filter, plan, cdtype)
            frame_idx = _frame_indices(plan)
            self._cache[key] = (plan, m_blocks, frame_idx)
        return self._cache[key]

    def __call__(self, x: jnp.ndarray, compute_dtype=None, out_dtype=None) -> jnp.ndarray:
        gen = _tpu_generation()
        cdtype = jnp.dtype(compute_dtype) if compute_dtype is not None else jnp.dtype(x.dtype)
        if cdtype not in (jnp.dtype(jnp.float32), jnp.dtype(jnp.bfloat16)):
            cdtype = jnp.dtype(jnp.float32)
        odtype = jnp.dtype(out_dtype or self.out_dtype or x.dtype)

        tile_k = self.tile_k
        if tile_k is None:
            tile_k = 512                                        # v6e / v7x default
            if gen == "v5" and cdtype == jnp.dtype(jnp.float32):
                tile_k = 256                                    # keep v5e DMA-bound
        plan, m_blocks, frame_idx = self._plan_for(x.shape[-1], cdtype, tile_k)
        return upsample1d_pallas(x, m_blocks, frame_idx, plan, cdtype, odtype,
                                 _vmem_cap_bytes())


# ----------------------------------------------------------------------------
# Pure-numpy reference (mirrors torch upsample1d semantics) for verification
# ----------------------------------------------------------------------------
def _ref_upsample(x, w, ratio, stride, pad, pad_left, pad_right):
    B, C, T = x.shape
    xp = np.concatenate(
        [np.repeat(x[..., :1], pad, axis=-1), x, np.repeat(x[..., -1:], pad, axis=-1)],
        axis=-1)
    L = xp.shape[-1]
    K = w.shape[-1]
    Lo = (L - 1) * stride + K
    y = np.zeros((B, C, Lo), dtype=np.float64)
    for i in range(L):
        y[..., i * stride:i * stride + K] += xp[..., i:i + 1].astype(np.float64) * w
    y = ratio * y
    return y[..., pad_left:Lo - pad_right]


if __name__ == "__main__":
    key = jax.random.PRNGKey(0)

    # --- small shapes, f32 end-to-end (single-tile dense path) -------------
    B, C, T, ratio = 2, 4, 16, 2
    x = jax.random.normal(key, (B, C, T), dtype=jnp.float32)
    mod = UpSample1d(ratio=ratio)
    y = jax.block_until_ready(mod(x))
    assert y.shape == (B, C, T * ratio), y.shape
    w_np = np.asarray(mod.upsample_filter, dtype=np.float64)
    y_ref = _ref_upsample(np.asarray(x), w_np, mod.ratio, mod.stride,
                          mod.pad, mod.pad_left, mod.pad_right)
    np.testing.assert_allclose(np.asarray(y), y_ref, rtol=1e-4, atol=1e-4)

    # --- multi-tile banded path (4 distinct M blocks, exact tiling) --------
    T2 = 768
    x2 = jax.random.normal(jax.random.PRNGKey(1), (B, C, T2), dtype=jnp.float32)
    mod2 = UpSample1d(ratio=ratio, tile_k=128)          # 128-sample tiles -> 6 tiles
    y2 = jax.block_until_ready(mod2(x2))
    assert y2.shape == (B, C, T2 * ratio), y2.shape
    y2_ref = _ref_upsample(np.asarray(x2), w_np, mod2.ratio, mod2.stride,
                           mod2.pad, mod2.pad_left, mod2.pad_right)
    np.testing.assert_allclose(np.asarray(y2), y2_ref, rtol=1e-4, atol=1e-4)

    # --- ragged last output tile (exercises masked partial store) ----------
    T3 = 200
    x3 = jax.random.normal(jax.random.PRNGKey(2), (B, C, T3), dtype=jnp.float32)
    y3 = jax.block_until_ready(mod2(x3))
    assert y3.shape == (B, C, T3 * ratio), y3.shape
    y3_ref = _ref_upsample(np.asarray(x3), w_np, mod2.ratio, mod2.stride,
                           mod2.pad, mod2.pad_left, mod2.pad_right)
    np.testing.assert_allclose(np.asarray(y3), y3_ref, rtol=1e-4, atol=1e-4)

    # --- bf16 MXU-operand path (f32 accumulation), loose tolerance ---------
    y4 = jax.block_until_ready(mod(x, compute_dtype=jnp.bfloat16))
    np.testing.assert_allclose(np.asarray(y4), y_ref, rtol=5e-2, atol=5e-2)

    print("KERNEL_OK")
</pallas_src>

<mosaic_0001>
module attributes {stable_mosaic.version = 11 : i64} {
  func.func @kernel(%arg0: i32, %arg1: i32, %arg2: memref<8x32xf32, #tpu.memory_space<vmem>>, %arg3: memref<1x32x32xf32, #tpu.memory_space<vmem>>, %arg4: memref<8x32xf32, #tpu.memory_space<vmem>>) attributes {dimension_semantics = [#tpu.dimension_semantics<parallel>, #tpu.dimension_semantics<parallel>], iteration_bounds = array<i64: 1, 1>, scalar_prefetch = 0 : i64, scratch_operands = 0 : i64, tpu.core_type = #tpu.core_type<tc>, window_params = [{transform_indices = @transform_0, window_bounds = array<i64: 8, 32>}, {pipeline_mode = #tpu.pipeline_mode<synchronous>, transform_indices = @transform_1, window_bounds = array<i64: 1, 32, 32>}, {transform_indices = @transform_2, window_bounds = array<i64: 8, 32>}]} {
    %c0 = arith.constant 0 : index
    %c0_0 = arith.constant 0 : index
    %0 = vector.load %arg2[%c0, %c0_0] : memref<8x32xf32, #tpu.memory_space<vmem>>, vector<8x32xf32>
    %1 = arith.index_cast %arg0 : i32 to index
    %c0_1 = arith.constant 0 : index
    %c0_2 = arith.constant 0 : index
    %2 = vector.load %arg3[%1, %c0_1, %c0_2] : memref<1x32x32xf32, #tpu.memory_space<vmem>>, vector<1x32x32xf32>
    %3 = vector.shape_cast %2 : vector<1x32x32xf32> to vector<32x32xf32>
    %cst = arith.constant dense<0.000000e+00> : vector<8x32xf32>
    %4 = tpu.matmul %0, %3, %cst {dimension_numbers = #tpu.dot_dimension_numbers<[1], [0], [0], [1], [0, 0, 1, 1], [], []>} : vector<8x32xf32>, vector<32x32xf32>, vector<8x32xf32> -> vector<8x32xf32>
    %c0_3 = arith.constant 0 : index
    %c0_4 = arith.constant 0 : index
    %5 = vector.load %arg4[%c0_3, %c0_4] : memref<8x32xf32, #tpu.memory_space<vmem>>, vector<8x32xf32>
    tpu.vector_store %arg4[%c0_3, %c0_4], %4 {strides = array<i32>} : memref<8x32xf32, #tpu.memory_space<vmem>>, vector<8x32xf32>,
    return
  }
  func.func @transform_0(%arg0: i32, %arg1: i32) -> (i32, i32) {
    %c0_i32 = arith.constant 0 : i32
    return %arg1, %arg0 : i32, i32
  }
  func.func @transform_1(%arg0: i32, %arg1: i32) -> (i32, i32, i32) {
    %c0_i32 = arith.constant 0 : i32
    %c0_i32_0 = arith.constant 0 : i32
    %c0_i32_1 = arith.constant 0 : i32
    %c0_i32_2 = arith.constant 0 : i32
    return %c0_i32, %c0_i32_0, %c0_i32_1 : i32, i32, i32
  }
  func.func @transform_2(%arg0: i32, %arg1: i32) -> (i32, i32) {
    %c0_i32 = arith.constant 0 : i32
    return %arg1, %arg0 : i32, i32
  }
}

</mosaic_0001>

<llo_original>
// kernel: tpu_custom_call.1
$region0: #{tpu_custom_call.1}
  #allocation0 [shape = 'u32[]', space=smem, size = 0x4, offset = 0x4, fixed_abs, tag = 'smem constant byte address 0x4 - core index']
  #allocation1 [shape = 'u32[72,128]{1,0:T(1,128)}', space=vmem, size = 0x9000, scoped, tag = 'internal scratch']
  %s0 = inlined_call_operand.hbm [shape: f32[8,32], index: 0, kind: input, shape index: {}]
  %s1 = inlined_call_operand.hbm [shape: f32[1,32,32], index: 1, kind: input, shape index: {}]
  %s2 = inlined_call_operand.hbm [shape: f32[8,32], index: 2, kind: output, shape index: {}]
  %s3 = sld [smem:[#allocation0]]
  $region26: #{tpu_custom_call.1} parent=0
    _
  %s5 = ssub.s32 1, %s3
  %s6 = scalar_select 0, %s5, %s3
  $region1: #{tpu_custom_call.1} parent=0
    #allocation2 [shape = 'u8[4096]{0}', space=vmem, size = 0x1000, scoped, tag = 'input window, operand 0, single buffered']
    #allocation3 [shape = 's32[1]{0}', space=sflag, size = 0x4, scoped, tag = 'scoped memory for tpu_custom_call.1']
    #allocation4 [shape = 's32[1]{0}', space=sflag, size = 0x4, scoped, tag = 'scoped memory for tpu_custom_call.1']
    #allocation5 [shape = 'u8[16384]{0}', space=vmem, size = 0x4000, scoped, tag = 'input window, operand 1, single buffered']
    #allocation6 [shape = 's32[1]{0}', space=sflag, size = 0x4, scoped, tag = 'scoped memory for tpu_custom_call.1']
    #allocation7 [shape = 'u8[4096]{0}', space=vmem, size = 0x1000, scoped, tag = 'output window, operand 0, single buffered']
    %7 = vsyncpa [#allocation3], 0
    %8 = vsyncpa [#allocation6], 0
    %9 = vsyncpa [#allocation4], 0
    // Predicated region
    $region2: #{tpu_custom_call.1} parent=1 // pred_check
      _
    $region3: #{tpu_custom_call.1} parent=1 // pred_check_branch
      %11 = sbr.rel (0) target = $region5
    $region4: #{tpu_custom_call.1} parent=1 // pred_region
      %13 = vsyncadd [#allocation3], 0
      %s15 = sshll.u32 %s0, 4
      %s16 = int_to_ptr.hbm [resolvable:$true] %s15
      %s17 = sshll.u32 [#allocation2], 4
      %s18 = int_to_ptr.vmem [resolvable:$true] %s17
      %20 = dma.hbm_to_vmem [thread:$0]  %s16, 128, %s18, [#allocation3]
    $region5: #{tpu_custom_call.1} parent=1 // pred_fallthru
      _
    // Predicated region
    $region6: #{tpu_custom_call.1} parent=1 // pred_check
      _
    $region7: #{tpu_custom_call.1} parent=1 // pred_check_branch
      %22 = sbr.rel (0) target = $region9
    $region8: #{tpu_custom_call.1} parent=1 // pred_region
      %24 = vsyncadd [#allocation6], 0
      %s25 = sshll.u32 %s1, 4
      %s26 = int_to_ptr.hbm [resolvable:$true] %s25
      %s27 = sshll.u32 [#allocation5], 4
      %s28 = int_to_ptr.vmem [resolvable:$true] %s27
      %33 = dma.hbm_to_vmem [thread:$0]  %s26, 512, %s28, [#allocation6], 128, 128, 8
    $region9: #{tpu_custom_call.1} parent=1 // pred_fallthru
      _
    // Predicated region
    $region10: #{tpu_custom_call.1} parent=1 // pred_check
      _
    $region11: #{tpu_custom_call.1} parent=1 // pred_check_branch
      %35 = sbr.rel (0) target = $region13
    $region12: #{tpu_custom_call.1} parent=1 // pred_region
      %37 = dma.done [#allocation3], 128
    $region13: #{tpu_custom_call.1} parent=1 // pred_fallthru
      _
    // Predicated region
    $region14: #{tpu_custom_call.1} parent=1 // pred_check
      _
    $region15: #{tpu_custom_call.1} parent=1 // pred_check_branch
      %39 = sbr.rel (0) target = $region17
    $region16: #{tpu_custom_call.1} parent=1 // pred_region
      %41 = dma.done [#allocation6], 512
    $region17: #{tpu_custom_call.1} parent=1 // pred_fallthru
      _
    %v42 = vld [vmem:[#allocation2] sm:$0xff]
    %s43 = smul.u32 0, 32
    %s44 = scalar_lea.vmem [#allocation5], %s43
    %v45 = vld [vmem:[%s44] sm:$0xff]
    %v46 = vld [vmem:[%s44 + $0x8] sm:$0xff]
    %v47 = vld [vmem:[%s44 + $0x10] sm:$0xff]
    %v48 = vld [vmem:[%s44 + $0x18] sm:$0xff]
    %vm49 = vcmask 261120
    %v51 = vsel %vm49, %v42, 0
    %53 = vmatpush.msra.mxu0 0.0
    %54 = vmatpush.msra.mxu0 0.0
    %55 = vmatpush.msra.mxu0 0.0
    %56 = vmatpush.msra.mxu0 0.0
    %57 = vmatpush.msra.mxu0 0.0
    %58 = vmatpush.msra.mxu0 0.0
    %59 = vmatpush.msra.mxu0 0.0
    %60 = vmatpush.msra.mxu0 0.0
    %61 = vmatpush.msra.mxu0 0.0
    %62 = vmatpush.msra.mxu0 0.0
    %63 = vmatpush.msra.mxu0 0.0
    %64 = vmatpush.msra.mxu0 0.0
    %65 = vmatpush.msra.mxu0 %v48
    %66 = vmatpush.msra.mxu0 %v47
    %67 = vmatpush.msra.mxu0 %v46
    %68 = vmatpush.msra.mxu0 %v45
    %69 = vmatmul.f32.gmra.mxu0 %v51
    %v70 = vpop.f32.mrf.mxu0
    %v71 = vadd.f32 0.0, %v70
    %72 = vdwg.mxu0
    %73 = vst.msk [vmem:[#allocation7] sm:$0xff] %vm49, %v71
    // Predicated region
    $region18: #{tpu_custom_call.1} parent=1 // pred_check
      _
    $region19: #{tpu_custom_call.1} parent=1 // pred_check_branch
      %75 = sbr.rel (0) target = $region21
    $region20: #{tpu_custom_call.1} parent=1 // pred_region
      %77 = vsyncadd [#allocation4], 0
      %s79 = sshll.u32 [#allocation7], 4
      %s80 = int_to_ptr.vmem [resolvable:$true] %s79
      %s81 = sshll.u32 %s2, 4
      %s82 = int_to_ptr.hbm [resolvable:$true] %s81
      %84 = dma.vmem_to_hbm [thread:$0]  %s80, 128, %s82, [#allocation4]
    $region21: #{tpu_custom_call.1} parent=1 // pred_fallthru
      _
    // Predicated region
    $region22: #{tpu_custom_call.1} parent=1 // pred_check
      _
    $region23: #{tpu_custom_call.1} parent=1 // pred_check_branch
      %86 = sbr.rel (0) target = $region25
    $region24: #{tpu_custom_call.1} parent=1 // pred_region
      %88 = dma.done [#allocation4], 128
    $region25: #{tpu_custom_call.1} parent=1 // pred_fallthru
      _
    %89 = vsyncpa [#allocation3], 1
    %90 = vsyncpa [#allocation6], 1
    %91 = vsyncpa [#allocation4], 1

</llo_original>
